<compile_context>
chip_gen: v7x
topology: tpu7x:2x2x1
jax: 0.10.0
libtpu: 0.0.40
codegen_flags: <defaults>
</compile_context>

<pallas_src>
import functools

import jax
import jax.numpy as jnp
from jax.experimental import pallas as pl
from jax.experimental.pallas import tpu as pltpu


def _avg_consensus_kernel(x_ref, o_ref, *, inv_t):
    # x_ref: (BN, T, BC) tile; o_ref: (BN, BC) lane-dense output tile.
    # Full T (reduction axis) lives inside the block -> single in-tile reduce,
    # accumulated in f32, then scaled by the compile-time constant 1/T.
    s = jnp.sum(x_ref[...], axis=1, dtype=jnp.float32)
    o_ref[...] = (s * inv_t).astype(o_ref.dtype)


# ~12 MiB per input block; double-buffered input (2x12 MiB) + output buffers
# stays well under the 48 MiB VMEM limit, which itself fits v7x's 64 MiB
# physical VMEM (and is trivially fine on v5e/v6e's 128 MiB).
_BLOCK_BUDGET_BYTES = 12 * 1024 * 1024
_VMEM_LIMIT_BYTES = 48 * 1024 * 1024
# Below this total size, pallas_call launch + per-step overhead dominates.
_MIN_PALLAS_BYTES = 256 * 1024


def avg_consensus(x: jax.Array, dim: int = 1, *, force_pallas: bool = False) -> jax.Array:
    """Pallas implementation of AvgConsensus: mean over `dim`, keepdim=True."""
    dim = dim % x.ndim
    itemsize = jnp.dtype(x.dtype).itemsize
    total_bytes = x.size * itemsize

    # Structural fallbacks (generic rank / dim) and the tiny-input fast path.
    if x.ndim != 3 or dim != 1:
        # TODO(synk): only the canonical (N, T, C) / dim=1 layout is lowered to Pallas.
        return jnp.mean(x, axis=dim, keepdims=True)
    if not force_pallas and total_bytes < _MIN_PALLAS_BYTES:
        return jnp.mean(x, axis=dim, keepdims=True)

    n, t, c = x.shape
    budget = _BLOCK_BUDGET_BYTES

    # Guard: minimum viable block is (8, T, min(C, 128)). If even that blows
    # the budget (extremely long T), stay correct via XLA's fused reduce.
    min_bc = min(c, 128)
    if 8 * t * min_bc * itemsize > budget:
        # TODO(synk): split T onto an "arbitrary" grid axis with a masked
        # accumulator for extreme segment counts instead of falling back.
        return jnp.mean(x, axis=1, keepdims=True)

    # ---- Feature tiling: prefer the full C axis as one contiguous slab. ----
    if 8 * t * c * itemsize <= budget:
        bc = c                                    # full dim -> exempt from %128 rule
    else:
        bc = max(128, (budget // (8 * t * itemsize)) // 128 * 128)
        bc = min(bc, c)

    # ---- Batch tiling: grow BN with the remaining budget (no padding). -----
    bn = max(8, (budget // (t * bc * itemsize)) // 8 * 8)
    if n < 8:
        bn = n                                    # full dim -> exempt from %8 rule
    else:
        bn = min(bn, (n // 8) * 8)

    grid_n = pl.cdiv(n, bn)
    grid_c = pl.cdiv(c, bc)

    # v7x has two TensorCores: ensure >= 2 "parallel" grid steps when the data
    # allows it so both cores (and DMA/compute pipelining) are used. Neutral
    # on single-TC v5e/v6e.
    if grid_n * grid_c == 1:
        if n >= 16:
            bn = max(8, (bn // 2) // 8 * 8)
            grid_n = pl.cdiv(n, bn)
        elif c >= 256:
            bc = (((c + 1) // 2) + 127) // 128 * 128
            grid_c = pl.cdiv(c, bc)

    cost = pl.CostEstimate(
        flops=n * t * c,
        transcendentals=0,
        bytes_accessed=n * t * c * itemsize + n * c * itemsize,
    )

    out = pl.pallas_call(
        functools.partial(_avg_consensus_kernel, inv_t=1.0 / t),
        out_shape=jax.ShapeDtypeStruct((n, c), x.dtype),
        grid_spec=pltpu.PrefetchScalarGridSpec(
            num_scalar_prefetch=0,
            grid=(grid_n, grid_c),
            in_specs=[pl.BlockSpec((bn, t, bc), lambda i, j: (i, 0, j))],
            out_specs=pl.BlockSpec((bn, bc), lambda i, j: (i, j)),
        ),
        compiler_params=pltpu.CompilerParams(
            dimension_semantics=("parallel", "parallel"),
            vmem_limit_bytes=_VMEM_LIMIT_BYTES,
        ),
        cost_estimate=cost,
    )(x)

    # Free layout plumbing outside the kernel: restore the keepdim axis.
    return out.reshape(n, 1, c)


if __name__ == "__main__":
    key = jax.random.PRNGKey(0)
    k1, k2, k3, k4, k5 = jax.random.split(key, 5)

    # 1) Small canonical shape (batch=2, segments=8, feats=32); force Pallas path.
    x = jax.random.normal(k1, (2, 8, 32), dtype=jnp.float32)
    out = jax.block_until_ready(avg_consensus(x, force_pallas=True))
    ref = jnp.mean(x, axis=1, keepdims=True)
    assert out.shape == (2, 1, 32) and out.dtype == x.dtype
    assert jnp.allclose(out, ref, atol=1e-6, rtol=1e-6), "mismatch (small f32)"

    # 2) Non-128-multiple feature dim (e.g. 400-way class scores), no padding pre-pass.
    x2 = jax.random.normal(k2, (3, 8, 400), dtype=jnp.float32)
    out2 = jax.block_until_ready(avg_consensus(x2, force_pallas=True))
    ref2 = jnp.mean(x2, axis=1, keepdims=True)
    assert out2.shape == (3, 1, 400)
    assert jnp.allclose(out2, ref2, atol=1e-5, rtol=1e-5), "mismatch (C=400)"

    # 3) bf16 input, partial trailing N block, f32 accumulation in-kernel.
    x3 = jax.random.normal(k3, (33, 12, 200), dtype=jnp.bfloat16)
    out3 = jax.block_until_ready(avg_consensus(x3, force_pallas=True))
    ref3 = jnp.mean(x3.astype(jnp.float32), axis=1, keepdims=True).astype(jnp.bfloat16)
    assert out3.shape == (33, 1, 200) and out3.dtype == jnp.bfloat16
    assert jnp.allclose(out3.astype(jnp.float32), ref3.astype(jnp.float32),
                        atol=2e-2, rtol=2e-2), "mismatch (bf16)"

    # 4) Medium shape taking the natural Pallas path; exercises the >=2-step split.
    x4 = jax.random.normal(k4, (64, 16, 768), dtype=jnp.float32)
    out4 = jax.block_until_ready(avg_consensus(x4))
    ref4 = jnp.mean(x4, axis=1, keepdims=True)
    assert out4.shape == (64, 1, 768)
    assert jnp.allclose(out4, ref4, atol=1e-5, rtol=1e-5), "mismatch (medium)"

    # 5) Wide-C shape that forces feature-axis tiling with a partial trailing C block.
    x5 = jax.random.normal(k5, (2, 64, 8192), dtype=jnp.float32)
    out5 = jax.block_until_ready(avg_consensus(x5, force_pallas=True))
    ref5 = jnp.mean(x5, axis=1, keepdims=True)
    assert out5.shape == (2, 1, 8192)
    assert jnp.allclose(out5, ref5, atol=1e-5, rtol=1e-5), "mismatch (C-split)"

    print("KERNEL_OK")
</pallas_src>

<mosaic_0001>
module attributes {stable_mosaic.version = 11 : i64} {
  func.func @_avg_consensus_kernel(%arg0: i32, %arg1: i32, %arg2: memref<2x8x32xf32, #tpu.memory_space<vmem>>, %arg3: memref<2x32xf32, #tpu.memory_space<vmem>>) attributes {dimension_semantics = [#tpu.dimension_semantics<parallel>, #tpu.dimension_semantics<parallel>], iteration_bounds = array<i64: 1, 1>, scalar_prefetch = 0 : i64, scratch_operands = 0 : i64, tpu.core_type = #tpu.core_type<tc>, window_params = [{transform_indices = @transform_0, window_bounds = array<i64: 2, 8, 32>}, {transform_indices = @transform_1, window_bounds = array<i64: 2, 32>}]} {
    %c0 = arith.constant 0 : index
    %c0_0 = arith.constant 0 : index
    %c0_1 = arith.constant 0 : index
    %0 = vector.load %arg2[%c0, %c0_0, %c0_1] : memref<2x8x32xf32, #tpu.memory_space<vmem>>, vector<2x8x32xf32>
    %cst = arith.constant dense<0.000000e+00> : vector<2x32xf32>
    %1 = vector.multi_reduction <add>, %0, %cst [1] : vector<2x8x32xf32> to vector<2x32xf32>
    %cst_2 = arith.constant 1.250000e-01 : f32
    %2 = vector.broadcast %cst_2 : f32 to vector<2x32xf32>
    %3 = arith.mulf %1, %2 : vector<2x32xf32>
    %c0_3 = arith.constant 0 : index
    %c0_4 = arith.constant 0 : index
    %4 = vector.load %arg3[%c0_3, %c0_4] : memref<2x32xf32, #tpu.memory_space<vmem>>, vector<2x32xf32>
    tpu.vector_store %arg3[%c0_3, %c0_4], %3 {strides = array<i32>} : memref<2x32xf32, #tpu.memory_space<vmem>>, vector<2x32xf32>,
    return
  }
  func.func @transform_0(%arg0: i32, %arg1: i32) -> (i32, i32, i32) {
    %c0_i32 = arith.constant 0 : i32
    %c0_i32_0 = arith.constant 0 : i32
    return %arg0, %c0_i32, %arg1 : i32, i32, i32
  }
  func.func @transform_1(%arg0: i32, %arg1: i32) -> (i32, i32) {
    %c0_i32 = arith.constant 0 : i32
    return %arg0, %arg1 : i32, i32
  }
}

</mosaic_0001>

<llo_original>
// kernel: tpu_custom_call.1
$region0: #{tpu_custom_call.1}
  #allocation0 [shape = 'u32[]', space=smem, size = 0x4, offset = 0x4, fixed_abs, tag = 'smem constant byte address 0x4 - core index']
  #allocation1 [shape = 'u32[144,128]{1,0:T(1,128)}', space=vmem, size = 0x12000, scoped, tag = 'internal scratch']
  %s0 = inlined_call_operand.hbm [shape: f32[2,8,32], index: 0, kind: input, shape index: {}]
  %s1 = inlined_call_operand.hbm [shape: f32[2,32], index: 1, kind: output, shape index: {}]
  %s2 = sld [smem:[#allocation0]]
  $region18: #{tpu_custom_call.1} parent=0
    _
  %s4 = ssub.s32 1, %s2
  %s5 = scalar_select 0, %s4, %s2
  $region1: #{tpu_custom_call.1} parent=0
    #allocation2 [shape = 'u8[8192]{0}', space=vmem, size = 0x2000, scoped, tag = 'input window, operand 0, single buffered']
    #allocation3 [shape = 's32[1]{0}', space=sflag, size = 0x4, scoped, tag = 'scoped memory for tpu_custom_call.1']
    #allocation4 [shape = 's32[1]{0}', space=sflag, size = 0x4, scoped, tag = 'scoped memory for tpu_custom_call.1']
    #allocation5 [shape = 'u8[1024]{0}', space=vmem, size = 0x400, scoped, tag = 'output window, operand 0, single buffered']
    %6 = vsyncpa [#allocation3], 0
    %7 = vsyncpa [#allocation4], 0
    // Predicated region
    $region2: #{tpu_custom_call.1} parent=1 // pred_check
      _
    $region3: #{tpu_custom_call.1} parent=1 // pred_check_branch
      %9 = sbr.rel (0) target = $region5
    $region4: #{tpu_custom_call.1} parent=1 // pred_region
      %s11 = ssub.s32 256, 256
      %12 = vsyncadd [#allocation3], %s11
      %s13 = sshll.u32 [#allocation2], 4
      %s14 = int_to_ptr.vmem [resolvable:$true] %s13
      %19 = dma.hbm_to_vmem [thread:$0]  %s0, 256, %s14, [#allocation3], 128, 128, 8
    $region5: #{tpu_custom_call.1} parent=1 // pred_fallthru
      _
    // Predicated region
    $region6: #{tpu_custom_call.1} parent=1 // pred_check
      _
    $region7: #{tpu_custom_call.1} parent=1 // pred_check_branch
      %21 = sbr.rel (0) target = $region9
    $region8: #{tpu_custom_call.1} parent=1 // pred_region
      %22 = dma.done [#allocation3], 256
    $region9: #{tpu_custom_call.1} parent=1 // pred_fallthru
      _
    %v23 = vld [vmem:[#allocation2] sm:$0xff]
    %v24 = vld [vmem:[#allocation2 + $0x8] sm:$0xff]
    %vm25 = vcmask 261120
    %v26 = vsel %vm25, %v23, 0.0
    %v27 = vrot.slane %v26, 4
    %v28 = vadd.f32 %v26, %v27
    %v29 = vrot.slane %v28, 2
    %v30 = vadd.f32 %v28, %v29
    %v31 = vrot.slane %v30, 1
    %v32 = vadd.f32 %v30, %v31
    %v33 = vsel %vm25, %v24, 0.0
    %v34 = vrot.slane %v33, 4
    %v35 = vadd.f32 %v33, %v34
    %v36 = vrot.slane %v35, 2
    %v37 = vadd.f32 %v35, %v36
    %v38 = vrot.slane %v37, 1
    %v39 = vadd.f32 %v37, %v38
    %v40 = vmul.f32 %v32, 0.125
    %v41 = vmul.f32 %v39, 0.125
    %vm44 = vcmask 1041409
    %v45 = vsel %vm44, %v41, %v40
    %vm47 = vcmask 254976
    %48 = vst.msk [vmem:[#allocation5] sm:$0x3] %vm47, %v45
    // Predicated region
    $region10: #{tpu_custom_call.1} parent=1 // pred_check
      _
    $region11: #{tpu_custom_call.1} parent=1 // pred_check_branch
      %50 = sbr.rel (0) target = $region13
    $region12: #{tpu_custom_call.1} parent=1 // pred_region
      %s52 = ssub.s32 32, 32
      %53 = vsyncadd [#allocation4], %s52
      %s55 = sshll.u32 [#allocation5], 4
      %s56 = int_to_ptr.vmem [resolvable:$true] %s55
      %58 = dma.vmem_to_hbm [thread:$0]  %s56, 32, %s1, [#allocation4]
    $region13: #{tpu_custom_call.1} parent=1 // pred_fallthru
      _
    // Predicated region
    $region14: #{tpu_custom_call.1} parent=1 // pred_check
      _
    $region15: #{tpu_custom_call.1} parent=1 // pred_check_branch
      %60 = sbr.rel (0) target = $region17
    $region16: #{tpu_custom_call.1} parent=1 // pred_region
      %61 = dma.done [#allocation4], 32
    $region17: #{tpu_custom_call.1} parent=1 // pred_fallthru
      _
    %62 = vsyncpa [#allocation3], 1
    %63 = vsyncpa [#allocation4], 1

</llo_original>
